<compile_context>
chip_gen: v5e
topology: v5e:2x2
jax: 0.10.0
libtpu: 0.0.40
codegen_flags: <defaults>
</compile_context>

<pallas_src>
import math
import functools

import jax
import jax.numpy as jnp
from jax import lax
from jax.experimental import pallas as pl
from jax.experimental.pallas import tpu as pltpu


# ----------------------------------------------------------------------------
# Pallas kernel: full SelfAttention forward for one batch element (NCH layout)
# ----------------------------------------------------------------------------
def _self_attention_nch_kernel(x_ref, wq_ref, bq_ref, wk_ref, bk_ref, wv_ref, bv_ref,
                               y_ref, w_ref, *, scale, compute_dtype):
    x = x_ref[...]                                    # [cin, N] (one batch element)
    use_lowp = compute_dtype != jnp.float32

    def proj(w_r, b_r):
        w = w_r[...]
        xx = x
        if use_lowp:                                  # bf16 MXU operands, f32 accumulation
            w = w.astype(compute_dtype)
            xx = xx.astype(compute_dtype)
        return jnp.dot(w, xx, preferred_element_type=jnp.float32) + b_r[...]

    q = proj(wq_ref, bq_ref)                          # [cout, N]
    k = proj(wk_ref, bk_ref)                          # [cout, N]
    v = proj(wv_ref, bv_ref)                          # [cout, N]

    qc = q.astype(compute_dtype) if use_lowp else q
    kc = k.astype(compute_dtype) if use_lowp else k

    # s[i, j] = sum_c k[c, i] * q[c, j]  ==  (k^T q)[i, j]
    s = lax.dot_general(kc, qc, (((0,), (0,)), ((), ())),
                        preferred_element_type=jnp.float32) * scale      # [N, N]

    # softmax over the k-points axis (torch: softmax(dim=1) of [B, N, N]) == axis 0 here
    s = s - jnp.max(s, axis=0, keepdims=True)
    p = jnp.exp(s)
    inv = pl.reciprocal(jnp.sum(p, axis=0, keepdims=True), approx=True)  # EUP slot
    w = p * inv                                                          # [N, N]

    wc = w.astype(compute_dtype) if use_lowp else w
    vc = v.astype(compute_dtype) if use_lowp else v
    y = jnp.dot(vc, wc, preferred_element_type=jnp.float32)              # [cout, N]

    y_ref[...] = y.astype(y_ref.dtype)
    w_ref[...] = w.astype(w_ref.dtype)


# ----------------------------------------------------------------------------
# Wrapper: grid over batch only; weights stay VMEM-resident across the grid
# ----------------------------------------------------------------------------
def self_attention_forward(x, params, *, compute_dtype=jnp.float32):
    B, cin, N = x.shape
    cout = params["wq"].shape[0]
    scale = 1.0 / math.sqrt(cout)

    kern = functools.partial(_self_attention_nch_kernel,
                             scale=scale, compute_dtype=compute_dtype)

    w_spec = pl.BlockSpec((cout, cin), lambda b: (0, 0))   # invariant across the grid
    b_spec = pl.BlockSpec((cout, 1), lambda b: (0, 0))

    flops = B * (3 * 2 * cout * cin * N      # q/k/v projections
                 + 2 * cout * N * N          # k^T q
                 + 2 * cout * N * N)         # v @ weights
    transcendentals = B * (N * N + N)        # exp + reciprocal
    bytes_accessed = 4 * (B * cin * N                     # x
                          + 3 * (cout * cin + cout)       # weights + biases
                          + B * cout * N + B * N * N)     # outputs

    y, w = pl.pallas_call(
        kern,
        out_shape=(jax.ShapeDtypeStruct((B, cout, N), jnp.float32),
                   jax.ShapeDtypeStruct((B, N, N), jnp.float32)),
        grid=(B,),
        in_specs=[
            pl.BlockSpec((None, cin, N), lambda b: (b, 0, 0)),   # x, batch-squeezed
            w_spec, b_spec,                                      # Wq, bq
            w_spec, b_spec,                                      # Wk, bk
            w_spec, b_spec,                                      # Wv, bv
        ],
        out_specs=(pl.BlockSpec((None, cout, N), lambda b: (b, 0, 0)),
                   pl.BlockSpec((None, N, N), lambda b: (b, 0, 0))),
        compiler_params=pltpu.CompilerParams(
            dimension_semantics=("parallel",)),                  # v7x: shard batch over 2 TCs
        cost_estimate=pl.CostEstimate(flops=flops,
                                      transcendentals=transcendentals,
                                      bytes_accessed=bytes_accessed),
    )(x, params["wq"], params["bq"], params["wk"], params["bk"],
      params["wv"], params["bv"])
    return y, w


# ----------------------------------------------------------------------------
# Deterministic parameter init (matches PyTorch Conv1d kernel_size=1 defaults)
# ----------------------------------------------------------------------------
def init_self_attention_params(key, cin, cout):
    ks = jax.random.split(key, 6)
    bound = 1.0 / math.sqrt(cin)   # kaiming-uniform(a=sqrt(5)) weight bound; same bias bound

    def u(k, shape):
        return jax.random.uniform(k, shape, jnp.float32, -bound, bound)

    return dict(
        wq=u(ks[0], (cout, cin)), bq=u(ks[1], (cout, 1)),
        wk=u(ks[2], (cout, cin)), bk=u(ks[3], (cout, 1)),
        wv=u(ks[4], (cout, cin)), bv=u(ks[5], (cout, 1)),
    )


# ----------------------------------------------------------------------------
# Pure-JAX reference (same math as the PyTorch module, f32)
# ----------------------------------------------------------------------------
def self_attention_ref(x, p, scale):
    q = jnp.einsum("oc,bcn->bon", p["wq"], x) + p["bq"][None]
    k = jnp.einsum("oc,bcn->bon", p["wk"], x) + p["bk"][None]
    v = jnp.einsum("oc,bcn->bon", p["wv"], x) + p["bv"][None]
    s = jnp.einsum("bci,bcj->bij", k, q) * scale      # k^T q
    w = jax.nn.softmax(s, axis=1)                     # torch softmax(dim=1)
    y = jnp.einsum("bci,bim->bcm", v, w)              # v @ weights
    return y, w


# ----------------------------------------------------------------------------
if __name__ == "__main__":
    # Small shapes consistent with the module: batch=2, channels=32 (cin=cout),
    # num_points=16, NCH layout (the module's default: Conv1d 1x1 projections).
    B, C, N = 2, 32, 16

    key = jax.random.PRNGKey(0)
    kx, kp = jax.random.split(key)
    x = jax.random.normal(kx, (B, C, N), jnp.float32)
    params = init_self_attention_params(kp, C, C)

    y, w = self_attention_forward(x, params)          # f32 operands (see notes above)
    y = jax.block_until_ready(y)
    w = jax.block_until_ready(w)

    y_ref, w_ref = self_attention_ref(x, params, 1.0 / math.sqrt(C))
    assert y.shape == (B, C, N) and w.shape == (B, N, N)
    # Tolerance covers the approximate (EUP) reciprocal in the softmax, which is
    # a pure relative factor on each softmax column.
    assert jnp.allclose(w, w_ref, atol=1e-3, rtol=2e-2), "attention-weights mismatch"
    assert jnp.allclose(y, y_ref, atol=1e-3, rtol=2e-2), "output mismatch vs reference"

    # TODO(synk): the module's `residual=True` path adds v to a (y, weights) tuple in
    # PyTorch and is not a well-defined tensor op; only the default residual=False is implemented.
    print("KERNEL_OK")
</pallas_src>

<mosaic_0001>
module attributes {stable_mosaic.version = 11 : i64} {
  func.func @_self_attention_nch_kernel(%arg0: i32, %arg1: memref<1x32x16xf32, #tpu.memory_space<vmem>>, %arg2: memref<32x32xf32, #tpu.memory_space<vmem>>, %arg3: memref<32x1xf32, #tpu.memory_space<vmem>>, %arg4: memref<32x32xf32, #tpu.memory_space<vmem>>, %arg5: memref<32x1xf32, #tpu.memory_space<vmem>>, %arg6: memref<32x32xf32, #tpu.memory_space<vmem>>, %arg7: memref<32x1xf32, #tpu.memory_space<vmem>>, %arg8: memref<1x32x16xf32, #tpu.memory_space<vmem>>, %arg9: memref<1x16x16xf32, #tpu.memory_space<vmem>>) attributes {dimension_semantics = [#tpu.dimension_semantics<parallel>], iteration_bounds = array<i64: 2>, scalar_prefetch = 0 : i64, scratch_operands = 0 : i64, tpu.core_type = #tpu.core_type<tc>, window_params = [{transform_indices = @transform_0, window_bounds = array<i64: 1, 32, 16>}, {pipeline_mode = #tpu.pipeline_mode<synchronous>, transform_indices = @transform_1, window_bounds = array<i64: 32, 32>}, {pipeline_mode = #tpu.pipeline_mode<synchronous>, transform_indices = @transform_2, window_bounds = array<i64: 32, 1>}, {pipeline_mode = #tpu.pipeline_mode<synchronous>, transform_indices = @transform_3, window_bounds = array<i64: 32, 32>}, {pipeline_mode = #tpu.pipeline_mode<synchronous>, transform_indices = @transform_4, window_bounds = array<i64: 32, 1>}, {pipeline_mode = #tpu.pipeline_mode<synchronous>, transform_indices = @transform_5, window_bounds = array<i64: 32, 32>}, {pipeline_mode = #tpu.pipeline_mode<synchronous>, transform_indices = @transform_6, window_bounds = array<i64: 32, 1>}, {transform_indices = @transform_7, window_bounds = array<i64: 1, 32, 16>}, {transform_indices = @transform_8, window_bounds = array<i64: 1, 16, 16>}]} {
    %c0 = arith.constant 0 : index
    %c0_0 = arith.constant 0 : index
    %c0_1 = arith.constant 0 : index
    %0 = vector.load %arg1[%c0, %c0_0, %c0_1] : memref<1x32x16xf32, #tpu.memory_space<vmem>>, vector<1x32x16xf32>
    %1 = vector.shape_cast %0 : vector<1x32x16xf32> to vector<32x16xf32>
    %c0_2 = arith.constant 0 : index
    %c0_3 = arith.constant 0 : index
    %2 = vector.load %arg2[%c0_2, %c0_3] : memref<32x32xf32, #tpu.memory_space<vmem>>, vector<32x32xf32>
    %cst = arith.constant dense<0.000000e+00> : vector<32x16xf32>
    %3 = tpu.matmul %2, %1, %cst {dimension_numbers = #tpu.dot_dimension_numbers<[1], [0], [0], [1], [0, 0, 1, 1], [], []>} : vector<32x32xf32>, vector<32x16xf32>, vector<32x16xf32> -> vector<32x16xf32>
    %c0_4 = arith.constant 0 : index
    %c0_5 = arith.constant 0 : index
    %4 = vector.load %arg3[%c0_4, %c0_5] : memref<32x1xf32, #tpu.memory_space<vmem>>, vector<32x1xf32>
    %5 = vector.broadcast %4 : vector<32x1xf32> to vector<32x16xf32>
    %6 = arith.addf %3, %5 : vector<32x16xf32>
    %c0_6 = arith.constant 0 : index
    %c0_7 = arith.constant 0 : index
    %7 = vector.load %arg4[%c0_6, %c0_7] : memref<32x32xf32, #tpu.memory_space<vmem>>, vector<32x32xf32>
    %cst_8 = arith.constant dense<0.000000e+00> : vector<32x16xf32>
    %8 = tpu.matmul %7, %1, %cst_8 {dimension_numbers = #tpu.dot_dimension_numbers<[1], [0], [0], [1], [0, 0, 1, 1], [], []>} : vector<32x32xf32>, vector<32x16xf32>, vector<32x16xf32> -> vector<32x16xf32>
    %c0_9 = arith.constant 0 : index
    %c0_10 = arith.constant 0 : index
    %9 = vector.load %arg5[%c0_9, %c0_10] : memref<32x1xf32, #tpu.memory_space<vmem>>, vector<32x1xf32>
    %10 = vector.broadcast %9 : vector<32x1xf32> to vector<32x16xf32>
    %11 = arith.addf %8, %10 : vector<32x16xf32>
    %c0_11 = arith.constant 0 : index
    %c0_12 = arith.constant 0 : index
    %12 = vector.load %arg6[%c0_11, %c0_12] : memref<32x32xf32, #tpu.memory_space<vmem>>, vector<32x32xf32>
    %cst_13 = arith.constant dense<0.000000e+00> : vector<32x16xf32>
    %13 = tpu.matmul %12, %1, %cst_13 {dimension_numbers = #tpu.dot_dimension_numbers<[1], [0], [0], [1], [0, 0, 1, 1], [], []>} : vector<32x32xf32>, vector<32x16xf32>, vector<32x16xf32> -> vector<32x16xf32>
    %c0_14 = arith.constant 0 : index
    %c0_15 = arith.constant 0 : index
    %14 = vector.load %arg7[%c0_14, %c0_15] : memref<32x1xf32, #tpu.memory_space<vmem>>, vector<32x1xf32>
    %15 = vector.broadcast %14 : vector<32x1xf32> to vector<32x16xf32>
    %16 = arith.addf %13, %15 : vector<32x16xf32>
    %cst_16 = arith.constant dense<0.000000e+00> : vector<16x16xf32>
    %17 = tpu.matmul %11, %6, %cst_16 {dimension_numbers = #tpu.dot_dimension_numbers<[0], [0], [1], [1], [0, 1, 1, 1], [], []>} : vector<32x16xf32>, vector<32x16xf32>, vector<16x16xf32> -> vector<16x16xf32>
    %cst_17 = arith.constant 0.176776692 : f32
    %18 = vector.broadcast %cst_17 : f32 to vector<16x16xf32>
    %19 = arith.mulf %17, %18 : vector<16x16xf32>
    %cst_18 = arith.constant dense<0xFF800000> : vector<16xf32>
    %20 = vector.multi_reduction <maximumf>, %19, %cst_18 [0] : vector<16x16xf32> to vector<16xf32>
    %21 = vector.shape_cast %20 : vector<16xf32> to vector<1x16xf32>
    %22 = vector.broadcast %21 : vector<1x16xf32> to vector<16x16xf32>
    %23 = arith.subf %19, %22 : vector<16x16xf32>
    %24 = math.exp %23 : vector<16x16xf32>
    %cst_19 = arith.constant dense<0.000000e+00> : vector<16xf32>
    %25 = vector.multi_reduction <add>, %24, %cst_19 [0] : vector<16x16xf32> to vector<16xf32>
    %26 = vector.shape_cast %25 : vector<16xf32> to vector<1x16xf32>
    %27 = tpu.reciprocal %26 {approx = true} : vector<1x16xf32> -> vector<1x16xf32>
    %28 = vector.broadcast %27 : vector<1x16xf32> to vector<16x16xf32>
    %29 = arith.mulf %24, %28 : vector<16x16xf32>
    %cst_20 = arith.constant dense<0.000000e+00> : vector<32x16xf32>
    %30 = tpu.matmul %16, %29, %cst_20 {dimension_numbers = #tpu.dot_dimension_numbers<[1], [0], [0], [1], [0, 0, 1, 1], [], []>} : vector<32x16xf32>, vector<16x16xf32>, vector<32x16xf32> -> vector<32x16xf32>
    %c0_21 = arith.constant 0 : index
    %c0_22 = arith.constant 0 : index
    %c0_23 = arith.constant 0 : index
    %31 = vector.load %arg8[%c0_21, %c0_22, %c0_23] : memref<1x32x16xf32, #tpu.memory_space<vmem>>, vector<1x32x16xf32>
    %32 = vector.shape_cast %31 : vector<1x32x16xf32> to vector<32x16xf32>
    %33 = vector.shape_cast %30 : vector<32x16xf32> to vector<1x32x16xf32>
    tpu.vector_store %arg8[%c0_21, %c0_22, %c0_23], %33 {strides = array<i32>} : memref<1x32x16xf32, #tpu.memory_space<vmem>>, vector<1x32x16xf32>,
    %c0_24 = arith.constant 0 : index
    %c0_25 = arith.constant 0 : index
    %c0_26 = arith.constant 0 : index
    %34 = vector.load %arg9[%c0_24, %c0_25, %c0_26] : memref<1x16x16xf32, #tpu.memory_space<vmem>>, vector<1x16x16xf32>
    %35 = vector.shape_cast %34 : vector<1x16x16xf32> to vector<16x16xf32>
    %36 = vector.shape_cast %29 : vector<16x16xf32> to vector<1x16x16xf32>
    tpu.vector_store %arg9[%c0_24, %c0_25, %c0_26], %36 {strides = array<i32>} : memref<1x16x16xf32, #tpu.memory_space<vmem>>, vector<1x16x16xf32>,
    return
  }
  func.func @transform_0(%arg0: i32) -> (i32, i32, i32) {
    %c0_i32 = arith.constant 0 : i32
    %c0_i32_0 = arith.constant 0 : i32
    %c0_i32_1 = arith.constant 0 : i32
    return %arg0, %c0_i32, %c0_i32_0 : i32, i32, i32
  }
  func.func @transform_1(%arg0: i32) -> (i32, i32) {
    %c0_i32 = arith.constant 0 : i32
    %c0_i32_0 = arith.constant 0 : i32
    %c0_i32_1 = arith.constant 0 : i32
    return %c0_i32, %c0_i32_0 : i32, i32
  }
  func.func @transform_2(%arg0: i32) -> (i32, i32) {
    %c0_i32 = arith.constant 0 : i32
    %c0_i32_0 = arith.constant 0 : i32
    %c0_i32_1 = arith.constant 0 : i32
    return %c0_i32, %c0_i32_0 : i32, i32
  }
  func.func @transform_3(%arg0: i32) -> (i32, i32) {
    %c0_i32 = arith.constant 0 : i32
    %c0_i32_0 = arith.constant 0 : i32
    %c0_i32_1 = arith.constant 0 : i32
    return %c0_i32, %c0_i32_0 : i32, i32
  }
  func.func @transform_4(%arg0: i32) -> (i32, i32) {
    %c0_i32 = arith.constant 0 : i32
    %c0_i32_0 = arith.constant 0 : i32
    %c0_i32_1 = arith.constant 0 : i32
    return %c0_i32, %c0_i32_0 : i32, i32
  }
  func.func @transform_5(%arg0: i32) -> (i32, i32) {
    %c0_i32 = arith.constant 0 : i32
    %c0_i32_0 = arith.constant 0 : i32
    %c0_i32_1 = arith.constant 0 : i32
    return %c0_i32, %c0_i32_0 : i32, i32
  }
  func.func @transform_6(%arg0: i32) -> (i32, i32) {
    %c0_i32 = arith.constant 0 : i32
    %c0_i32_0 = arith.constant 0 : i32
    %c0_i32_1 = arith.constant 0 : i32
    return %c0_i32, %c0_i32_0 : i32, i32
  }
  func.func @transform_7(%arg0: i32) -> (i32, i32, i32) {
    %c0_i32 = arith.constant 0 : i32
    %c0_i32_0 = arith.constant 0 : i32
    %c0_i32_1 = arith.constant 0 : i32
    return %arg0, %c0_i32, %c0_i32_0 : i32, i32, i32
  }
  func.func @transform_8(%arg0: i32) -> (i32, i32, i32) {
    %c0_i32 = arith.constant 0 : i32
    %c0_i32_0 = arith.constant 0 : i32
    %c0_i32_1 = arith.constant 0 : i32
    return %arg0, %c0_i32, %c0_i32_0 : i32, i32, i32
  }
}

</mosaic_0001>

<llo_original>
// kernel: tpu_custom_call.1
$region0: #{tpu_custom_call.1}
  #allocation0 [shape = 'u32[]', space=smem, size = 0x4, offset = 0x4, fixed_abs, tag = 'smem constant byte address 0x4 - core index']
  #allocation1 [shape = 'u32[72,128]{1,0:T(1,128)}', space=vmem, size = 0x9000, scoped, tag = 'internal scratch']
  %s0 = inlined_call_operand.vmem [shape: f32[2,32,16], index: 0, kind: input, shape index: {}]
  %s1 = inlined_call_operand.vmem [shape: f32[32,32], index: 1, kind: input, shape index: {}]
  %s2 = inlined_call_operand.vmem [shape: f32[32,1], index: 2, kind: input, shape index: {}]
  %s3 = inlined_call_operand.vmem [shape: f32[32,32], index: 3, kind: input, shape index: {}]
  %s4 = inlined_call_operand.vmem [shape: f32[32,1], index: 4, kind: input, shape index: {}]
  %s5 = inlined_call_operand.vmem [shape: f32[32,32], index: 5, kind: input, shape index: {}]
  %s6 = inlined_call_operand.vmem [shape: f32[32,1], index: 6, kind: input, shape index: {}]
  %s7 = inlined_call_operand.vmem [shape: f32[2,32,16], index: 7, kind: output, shape index: {0}]
  %s8 = inlined_call_operand.hbm [shape: f32[2,16,16], index: 8, kind: output, shape index: {1}]
  %9 = xla_tuple %s7, %s8
  %s10 = sld [smem:[#allocation0]]
  $region69: #{tpu_custom_call.1} parent=0
    _
  %s12 = ssub.s32 1, %s10
  %s13 = scalar_select 0, %s12, %s10
  $region1: #{tpu_custom_call.1} parent=0
    #allocation2 [shape = 'u8[16384]{0}', space=vmem, size = 0x4000, scoped, tag = 'output window, operand 1']
    #allocation3 [shape = 's32[2]{0}', space=sflag, size = 0x8, scoped, tag = 'scoped memory for tpu_custom_call.1']
    %14 = vsyncpa [#allocation3], 0
    %s15 = scalar_lea.sflag [#allocation3], 1
    %16 = vsyncpa %s15, 0
    loop: start=0, step=1, limit=4
    $region2: #{tpu_custom_call.1} parent=1 // loop_pre_header
      _
    $region3: #{tpu_custom_call.1} parent=1 // loop_header
      %s18 = sphi 0, %s22
      %p19 = scmp.ge.s32.totalorder %s18, 4
      %s28 = sphi 0, %s30
      %s31 = sphi 0, %s28
      %s32 = sphi 0, %s31
      %s48 = sphi 0, %s32
      %s52 = sphi 0, %s52
      %s54 = sphi 0, %s52
      %s55 = sphi 0, %s54
      %s69 = sphi 0, %s55
      %s73 = sphi 0, %s73
      %s75 = sphi 0, %s73
      %s76 = sphi 0, %s75
      %s90 = sphi 0, %s76
      %s94 = sphi 0, %s94
      %s96 = sphi 0, %s94
      %s97 = sphi 0, %s96
      %s111 = sphi 0, %s97
      %s115 = sphi 0, %s115
      %s117 = sphi 0, %s115
      %s118 = sphi 0, %s117
      %s132 = sphi 0, %s118
      %s136 = sphi 0, %s136
      %s138 = sphi 0, %s136
      %s139 = sphi 0, %s138
      %s153 = sphi 0, %s139
      %s157 = sphi 0, %s157
      %s159 = sphi 0, %s157
      %s160 = sphi 0, %s159
      %s174 = sphi 0, %s160
      %s180 = sphi 0, %s182
      %s183 = sphi 0, %s180
      %s184 = sphi 0, %s183
      %s200 = sphi 0, %s184
      %s206 = sphi 0, %s208
      %s209 = sphi 0, %s206
      %s210 = sphi 0, %s209
      %s226 = sphi 0, %s210
    $region4: #{tpu_custom_call.1} parent=1 // loop_header_branch
      %21 = sbr.rel (%p19) target = $region8
    $region5: #{tpu_custom_call.1} parent=1 // loop_body
      %s23 = ssub.s32 %s18, 1
      %s24 = ssub.s32 %s18, 2
      %s25 = sadd.s32 %s18, 1
      %s26 = ssub.s32 %s18, %s25
      %p27 = scmp.eq.s32.totalorder %s26, 0
      %s29 = sadd.s32 %s28, 1
      %s30 = scalar_select %p27, %s28, %s29
      %p33 = pneg %p27
      %p34 = scmp.eq.s32.totalorder %s18, 1
      %p35 = por %p33, %p34
      %p36 = scmp.ne.s32.totalorder %s28, %s31
      %p37 = scmp.eq.s32.totalorder %s18, 0
      %p38 = por %p36, %p37
      %p39 = scmp.ne.s32.totalorder %s28, %s31
      %p40 = scmp.eq.s32.totalorder %s23, 1
      %p41 = por %p39, %p40
      %p42 = scmp.ne.s32.totalorder %s31, %s32
      %p43 = scmp.eq.s32.totalorder %s23, 0
      %p44 = por %p42, %p43
      %p45 = scmp.ne.s32.totalorder %s31, %s32
      %p46 = scmp.eq.s32.totalorder %s24, 1
      %p47 = por %p45, %p46
      %p49 = scmp.ne.s32.totalorder %s32, %s48
      %p50 = scmp.eq.s32.totalorder %s24, 0
      %p51 = por %p49, %p50
      %s53 = sadd.s32 %s52, 1
      %p56 = scmp.eq.s32.totalorder %s18, 1
      %p57 = scmp.ne.s32.totalorder %s52, %s54
      %p58 = scmp.eq.s32.totalorder %s18, 0
      %p59 = por %p57, %p58
      %p60 = scmp.ne.s32.totalorder %s52, %s54
      %p61 = scmp.eq.s32.totalorder %s23, 1
      %p62 = por %p60, %p61
      %p63 = scmp.ne.s32.totalorder %s54, %s55
      %p64 = scmp.eq.s32.totalorder %s23, 0
      %p65 = por %p63, %p64
      %p66 = scmp.ne.s32.totalorder %s54, %s55
      %p67 = scmp.eq.s32.totalorder %s24, 1
      %p68 = por %p66, %p67
      %p70 = scmp.ne.s32.totalorder %s55, %s69
      %p71 = scmp.eq.s32.totalorder %s24, 0
      %p72 = por %p70, %p71
      %s74 = sadd.s32 %s73, 1
      %p77 = scmp.eq.s32.totalorder %s18, 1
      %p78 = scmp.ne.s32.totalorder %s73, %s75
      %p79 = scmp.eq.s32.totalorder %s18, 0
      %p80 = por %p78, %p79
      %p81 = scmp.ne.s32.totalorder %s73, %s75
      %p82 = scmp.eq.s32.totalorder %s23, 1
      %p83 = por %p81, %p82
      %p84 = scmp.ne.s32.totalorder %s75, %s76
      %p85 = scmp.eq.s32.totalorder %s23, 0
      %p86 = por %p84, %p85
      %p87 = scmp.ne.s32.totalorder %s75, %s76
      %p88 = scmp.eq.s32.totalorder %s24, 1
      %p89 = por %p87, %p88
      %p91 = scmp.ne.s32.totalorder %s76, %s90
      %p92 = scmp.eq.s32.totalorder %s24, 0
      %p93 = por %p91, %p92
      %s95 = sadd.s32 %s94, 1
      %p98 = scmp.eq.s32.totalorder %s18, 1
      %p99 = scmp.ne.s32.totalorder %s94, %s96
      %p100 = scmp.eq.s32.totalorder %s18, 0
      %p101 = por %p99, %p100
      %p102 = scmp.ne.s32.totalorder %s94, %s96
      %p103 = scmp.eq.s32.totalorder %s23, 1
      %p104 = por %p102, %p103
      %p105 = scmp.ne.s32.totalorder %s96, %s97
      %p106 = scmp.eq.s32.totalorder %s23, 0
      %p107 = por %p105, %p106
      %p108 = scmp.ne.s32.totalorder %s96, %s97
      %p109 = scmp.eq.s32.totalorder %s24, 1
      %p110 = por %p108, %p109
      %p112 = scmp.ne.s32.totalorder %s97, %s111
      %p113 = scmp.eq.s32.totalorder %s24, 0
      %p114 = por %p112, %p113
      %s116 = sadd.s32 %s115, 1
      %p119 = scmp.eq.s32.totalorder %s18, 1
      %p120 = scmp.ne.s32.totalorder %s115, %s117
      %p121 = scmp.eq.s32.totalorder %s18, 0
      %p122 = por %p120, %p121
      %p123 = scmp.ne.s32.totalorder %s115, %s117
      %p124 = scmp.eq.s32.totalorder %s23, 1
      %p125 = por %p123, %p124
      %p126 = scmp.ne.s32.totalorder %s117, %s118
      %p127 = scmp.eq.s32.totalorder %s23, 0
      %p128 = por %p126, %p127
      %p129 = scmp.ne.s32.totalorder %s117, %s118
      %p130 = scmp.eq.s32.totalorder %s24, 1
      %p131 = por %p129, %p130
      %p133 = scmp.ne.s32.totalorder %s118, %s132
      %p134 = scmp.eq.s32.totalorder %s24, 0
      %p135 = por %p133, %p134
      %s137 = sadd.s32 %s136, 1
      %p140 = scmp.eq.s32.totalorder %s18, 1
      %p141 = scmp.ne.s32.totalorder %s136, %s138
      %p142 = scmp.eq.s32.totalorder %s18, 0
      %p143 = por %p141, %p142
      %p144 = scmp.ne.s32.totalorder %s136, %s138
      %p145 = scmp.eq.s32.totalorder %s23, 1
      %p146 = por %p144, %p145
      %p147 = scmp.ne.s32.totalorder %s138, %s139
      %p148 = scmp.eq.s32.totalorder %s23, 0
      %p149 = por %p147, %p148
      %p150 = scmp.ne.s32.totalorder %s138, %s139
      %p151 = scmp.eq.s32.totalorder %s24, 1
      %p152 = por %p150, %p151
      %p154 = scmp.ne.s32.totalorder %s139, %s153
      %p155 = scmp.eq.s32.totalorder %s24, 0
      %p156 = por %p154, %p155
      %s158 = sadd.s32 %s157, 1
      %p161 = scmp.eq.s32.totalorder %s18, 1
      %p162 = scmp.ne.s32.totalorder %s157, %s159
      %p163 = scmp.eq.s32.totalorder %s18, 0
      %p164 = por %p162, %p163
      %p165 = scmp.ne.s32.totalorder %s157, %s159
      %p166 = scmp.eq.s32.totalorder %s23, 1
      %p167 = por %p165, %p166
      %p168 = scmp.ne.s32.totalorder %s159, %s160
      %p169 = scmp.eq.s32.totalorder %s23, 0
      %p170 = por %p168, %p169
      %p171 = scmp.ne.s32.totalorder %s159, %s160
      %p172 = scmp.eq.s32.totalorder %s24, 1
      %p173 = por %p171, %p172
      %p175 = scmp.ne.s32.totalorder %s160, %s174
      %p176 = scmp.eq.s32.totalorder %s24, 0
      %p177 = por %p175, %p176
      %s178 = ssub.s32 %s18, %s25
      %p179 = scmp.eq.s32.totalorder %s178, 0
      %s181 = sadd.s32 %s180, 1
      %s182 = scalar_select %p179, %s180, %s181
      %p185 = pneg %p179
      %p186 = scmp.eq.s32.totalorder %s18, 1
      %p187 = por %p185, %p186
      %p188 = scmp.ne.s32.totalorder %s180, %s183
      %p189 = scmp.eq.s32.totalorder %s18, 0
      %p190 = por %p188, %p189
      %p191 = scmp.ne.s32.totalorder %s180, %s183
      %p192 = scmp.eq.s32.totalorder %s23, 1
      %p193 = por %p191, %p192
      %p194 = scmp.ne.s32.totalorder %s183, %s184
      %p195 = scmp.eq.s32.totalorder %s23, 0
      %p196 = por %p194, %p195
      %p197 = scmp.ne.s32.totalorder %s183, %s184
      %p198 = scmp.eq.s32.totalorder %s24, 1
      %p199 = por %p197, %p198
      %p201 = scmp.ne.s32.totalorder %s184, %s200
      %p202 = scmp.eq.s32.totalorder %s24, 0
      %p203 = por %p201, %p202
      %s204 = ssub.s32 %s18, %s25
      %p205 = scmp.eq.s32.totalorder %s204, 0
      %s207 = sadd.s32 %s206, 1
      %s208 = scalar_select %p205, %s206, %s207
      %p211 = pneg %p205
      %p212 = scmp.eq.s32.totalorder %s18, 1
      %p213 = por %p211, %p212
      %p214 = scmp.ne.s32.totalorder %s206, %s209
      %p215 = scmp.eq.s32.totalorder %s18, 0
      %p216 = por %p214, %p215
      %p217 = scmp.ne.s32.totalorder %s206, %s209
      %p218 = scmp.eq.s32.totalorder %s23, 1
      %p219 = por %p217, %p218
      %p220 = scmp.ne.s32.totalorder %s209, %s210
      %p221 = scmp.eq.s32.totalorder %s23, 0
      %p222 = por %p220, %p221
      %p223 = scmp.ne.s32.totalorder %s209, %s210
      %p224 = scmp.eq.s32.totalorder %s24, 1
      %p225 = por %p223, %p224
      %p227 = scmp.ne.s32.totalorder %s210, %s226
      %p228 = scmp.eq.s32.totalorder %s24, 0
      %p229 = por %p227, %p228
      %p230 = scmp.le.s32.totalorder 1, %s18
      %p231 = scmp.lt.s32.totalorder %s18, 3
      %p232 = pnand %p230, %p231
      %p233 = pneg %p232
      // Predicated region
      $region9: #{tpu_custom_call.1} parent=5 // pred_check
        _
      $region10: #{tpu_custom_call.1} parent=5 // pred_check_branch
        %235 = sbr.rel (%p232) target = $region12
      $region11: #{tpu_custom_call.1} parent=5 // pred_region
        %s236 = ssub.s32 %s18, 1
        // Predicated region
        $region13: #{tpu_custom_call.1} parent=11 // pred_check
          %p237 = pneg %p65
        $region14: #{tpu_custom_call.1} parent=11 // pred_check_branch
          %239 = sbr.rel (%p237) target = $region16
        $region15: #{tpu_custom_call.1} parent=11 // pred_region
          _
        $region16: #{tpu_custom_call.1} parent=11 // pred_fallthru
          _
        // Predicated region
        $region17: #{tpu_custom_call.1} parent=11 // pred_check
          %p240 = pneg %p86
        $region18: #{tpu_custom_call.1} parent=11 // pred_check_branch
          %242 = sbr.rel (%p240) target = $region20
        $region19: #{tpu_custom_call.1} parent=11 // pred_region
          _
        $region20: #{tpu_custom_call.1} parent=11 // pred_fallthru
          _
        // Predicated region
        $region21: #{tpu_custom_call.1} parent=11 // pred_check
          %p243 = pneg %p107
        $region22: #{tpu_custom_call.1} parent=11 // pred_check_branch
          %245 = sbr.rel (%p243) target = $region24
        $region23: #{tpu_custom_call.1} parent=11 // pred_region
          _
        $region24: #{tpu_custom_call.1} parent=11 // pred_fallthru
          _
        // Predicated region
        $region25: #{tpu_custom_call.1} parent=11 // pred_check
          %p246 = pneg %p128
        $region26: #{tpu_custom_call.1} parent=11 // pred_check_branch
          %248 = sbr.rel (%p246) target = $region28
        $region27: #{tpu_custom_call.1} parent=11 // pred_region
          _
        $region28: #{tpu_custom_call.1} parent=11 // pred_fallthru
          _
        // Predicated region
        $region29: #{tpu_custom_call.1} parent=11 // pred_check
          %p249 = pneg %p149
        $region30: #{tpu_custom_call.1} parent=11 // pred_check_branch
          %251 = sbr.rel (%p249) target = $region32
        $region31: #{tpu_custom_call.1} parent=11 // pred_region
          _
        $region32: #{tpu_custom_call.1} parent=11 // pred_fallthru
          _
        // Predicated region
        $region33: #{tpu_custom_call.1} parent=11 // pred_check
          %p252 = pneg %p170
        $region34: #{tpu_custom_call.1} parent=11 // pred_check_branch
          %254 = sbr.rel (%p252) target = $region36
        $region35: #{tpu_custom_call.1} parent=11 // pred_region
          _
        $region36: #{tpu_custom_call.1} parent=11 // pred_fallthru
          _
      $region12: #{tpu_custom_call.1} parent=5 // pred_fallthru
        _
      %p255 = scmp.lt.s32.totalorder %s18, 2
      // Predicated region
      $region37: #{tpu_custom_call.1} parent=5 // pred_check
        %p256 = pneg %p255
      $region38: #{tpu_custom_call.1} parent=5 // pred_check_branch
        %258 = sbr.rel (%p256) target = $region40
      $region39: #{tpu_custom_call.1} parent=5 // pred_region
        // Predicated region
        $region41: #{tpu_custom_call.1} parent=39 // pred_check
          %p259 = pneg %p38
        $region42: #{tpu_custom_call.1} parent=39 // pred_check_branch
          %261 = sbr.rel (%p259) target = $region44
        $region43: #{tpu_custom_call.1} parent=39 // pred_region
          %p262 = scmp.lt.s32.totalorder %s18, 1
          %s263 = scalar_select %p262, %s18, 1
          %s264 = smul.addr %s263, 4
          %s265 = smul.addr %s264, 8
          %s266 = scalar_lea.vmem %s0, %s265
        $region44: #{tpu_custom_call.1} parent=39 // pred_fallthru
          _
      $region40: #{tpu_custom_call.1} parent=5 // pred_fallthru
        _
      %p267 = scmp.le.s32.totalorder 1, %s18
      %p268 = scmp.lt.s32.totalorder %s18, 3
      %p269 = pnand %p267, %p268
      %p270 = pneg %p269
      // Predicated region
      $region45: #{tpu_custom_call.1} parent=5 // pred_check
        _
      $region46: #{tpu_custom_call.1} parent=5 // pred_check_branch
        %272 = sbr.rel (%p269) target = $region48
      $region47: #{tpu_custom_call.1} parent=5 // pred_region
        %s273 = ssub.s32 %s18, 1
        %p274 = scmp.lt.s32.totalorder %s23, 1
        %s275 = scalar_select %p274, %s23, 1
        %s276 = smul.addr %s275, 4
        %s277 = smul.addr %s276, 8
        %s278 = scalar_lea.vmem %s0, %s277
        %p279 = pneg %p44
        %p280 = pneg %p41
        %p281 = pneg %p65
        %p282 = pneg %p62
        %p283 = pneg %p86
        %p284 = pneg %p83
        %p285 = pneg %p107
        %p286 = pneg %p104
        %p287 = pneg %p128
        %p288 = pneg %p125
        %p289 = pneg %p149
        %p290 = pneg %p146
        %p291 = pneg %p170
        %p292 = pneg %p167
        %p293 = pneg %p196
        %p294 = pneg %p193
        %p295 = scmp.lt.s32.totalorder %s23, 1
        %s296 = scalar_select %p295, %s23, 1
        %s297 = smul.addr %s296, 4
        %s298 = smul.addr %s297, 8
        %s299 = scalar_lea.vmem %s7, %s298
        %p300 = pneg %p222
        %p301 = pneg %p219
        %s302 = sand.u32 %s209, 1
        %s303 = scalar_lea.sflag [#allocation3], %s302
        %s304 = sand.u32 %s209, 1
        %s305 = smul.addr %s304, 16
        %s306 = scalar_lea.vmem [#allocation2], %s305
        %p307 = scmp.lt.s32.totalorder %s23, 1
        %s308 = scalar_select %p307, %s23, 1
        %s309 = smul.addr %s308, 4
        %s310 = smul.addr %s309, 8
        %s311 = scalar_lea.vmem %s0, %s310
        %p312 = scmp.lt.s32.totalorder %s23, 1
        %s313 = scalar_select %p312, %s23, 1
        %s314 = smul.addr %s313, 4
        %s315 = smul.addr %s314, 8
        %s316 = scalar_lea.vmem %s7, %s315
        %v317 = vld [vmem:[%s311] sm:$0xff]
        %v318 = vld [vmem:[%s311 + $0x8] sm:$0xff]
        %v319 = vld [vmem:[%s311 + $0x10] sm:$0xff]
        %v320 = vld [vmem:[%s311 + $0x18] sm:$0xff]
        %v321 = vld [vmem:[%s1] sm:$0xff]
        %v322 = vld [vmem:[%s1 + $0x8] sm:$0xff]
        %v323 = vld [vmem:[%s1 + $0x10] sm:$0xff]
        %v324 = vld [vmem:[%s1 + $0x18] sm:$0xff]
        %v325 = vld [vmem:[%s2] sm:$0xff]
        %v326 = vld [vmem:[%s2 + $0x8] sm:$0xff]
        %v327 = vld [vmem:[%s2 + $0x10] sm:$0xff]
        %v328 = vld [vmem:[%s2 + $0x18] sm:$0xff]
        %330 = vset.pattern.permute.xlu0 0
        %331 = vperm.xlu0 %330, %v325
        %v332 = vpop.permute.xlu0 %331
        %335 = vset.pattern.permute.xlu0 0
        %336 = vperm.xlu0 %335, %v326
        %v337 = vpop.permute.xlu0 %336
        %340 = vset.pattern.permute.xlu0 0
        %341 = vperm.xlu0 %340, %v327
        %v342 = vpop.permute.xlu0 %341
        %345 = vset.pattern.permute.xlu0 0
        %346 = vperm.xlu0 %345, %v328
        %v347 = vpop.permute.xlu0 %346
        %vm349 = vcmask 261120
        %v351 = vsel %vm349, %v321, 0
        %v354 = vsel %vm349, %v322, 0
        %v357 = vsel %vm349, %v323, 0
        %v360 = vsel %vm349, %v324, 0
        %362 = vmatpush.msra.mxu0 0.0
        %363 = vmatpush.msra.mxu0 0.0
        %364 = vmatpush.msra.mxu0 0.0
        %365 = vmatpush.msra.mxu0 0.0
        %366 = vmatpush.msra.mxu0 0.0
        %367 = vmatpush.msra.mxu0 0.0
        %368 = vmatpush.msra.mxu0 0.0
        %369 = vmatpush.msra.mxu0 0.0
        %370 = vmatpush.msra.mxu0 0.0
        %371 = vmatpush.msra.mxu0 0.0
        %372 = vmatpush.msra.mxu0 0.0
        %373 = vmatpush.msra.mxu0 0.0
        %374 = vmatpush.msra.mxu0 %v320
        %375 = vmatpush.msra.mxu0 %v319
        %376 = vmatpush.msra.mxu0 %v318
        %377 = vmatpush.msra.mxu0 %v317
        %378 = vmatmul.f32.gmra.mxu0 %v351
        %v379 = vpop.f32.mrf.mxu0
        %v380 = vadd.f32 %v332, %v379
        %381 = vmatmul.f32.gmra.mxu0 %v354
        %v382 = vpop.f32.mrf.mxu0
        %v383 = vadd.f32 %v337, %v382
        %384 = vmatmul.f32.gmra.mxu0 %v357
        %v385 = vpop.f32.mrf.mxu0
        %v386 = vadd.f32 %v342, %v385
        %387 = vmatmul.f32.gmra.mxu0 %v360
        %v388 = vpop.f32.mrf.mxu0
        %v389 = vadd.f32 %v347, %v388
        %390 = vdwg.mxu0
        %v391 = vld [vmem:[%s3] sm:$0xff]
        %v392 = vld [vmem:[%s3 + $0x8] sm:$0xff]
        %v393 = vld [vmem:[%s3 + $0x10] sm:$0xff]
        %v394 = vld [vmem:[%s3 + $0x18] sm:$0xff]
        %v395 = vld [vmem:[%s4] sm:$0xff]
        %v396 = vld [vmem:[%s4 + $0x8] sm:$0xff]
        %v397 = vld [vmem:[%s4 + $0x10] sm:$0xff]
        %v398 = vld [vmem:[%s4 + $0x18] sm:$0xff]
        %400 = vset.pattern.permute.xlu0 0
        %401 = vperm.xlu0 %400, %v395
        %v402 = vpop.permute.xlu0 %401
        %405 = vset.pattern.permute.xlu0 0
        %406 = vperm.xlu0 %405, %v396
        %v407 = vpop.permute.xlu0 %406
        %410 = vset.pattern.permute.xlu0 0
        %411 = vperm.xlu0 %410, %v397
        %v412 = vpop.permute.xlu0 %411
        %415 = vset.pattern.permute.xlu0 0
        %416 = vperm.xlu0 %415, %v398
        %v417 = vpop.permute.xlu0 %416
        %v420 = vsel %vm349, %v391, 0
        %v423 = vsel %vm349, %v392, 0
        %v426 = vsel %vm349, %v393, 0
        %v429 = vsel %vm349, %v394, 0
        %431 = vmatpush.msra.mxu0 0.0
        %432 = vmatpush.msra.mxu0 0.0
        %433 = vmatpush.msra.mxu0 0.0
        %434 = vmatpush.msra.mxu0 0.0
        %435 = vmatpush.msra.mxu0 0.0
        %436 = vmatpush.msra.mxu0 0.0
        %437 = vmatpush.msra.mxu0 0.0
        %438 = vmatpush.msra.mxu0 0.0
        %439 = vmatpush.msra.mxu0 0.0
        %440 = vmatpush.msra.mxu0 0.0
        %441 = vmatpush.msra.mxu0 0.0
        %442 = vmatpush.msra.mxu0 0.0
        %443 = vmatpush.msra.mxu0 %v320
        %444 = vmatpush.msra.mxu0 %v319
        %445 = vmatpush.msra.mxu0 %v318
        %446 = vmatpush.msra.mxu0 %v317
        %447 = vmatmul.f32.gmra.mxu0 %v420
        %v448 = vpop.f32.mrf.mxu0
        %v449 = vadd.f32 %v402, %v448
        %450 = vmatmul.f32.gmra.mxu0 %v423
        %v451 = vpop.f32.mrf.mxu0
        %v452 = vadd.f32 %v407, %v451
        %453 = vmatmul.f32.gmra.mxu0 %v426
        %v454 = vpop.f32.mrf.mxu0
        %v455 = vadd.f32 %v412, %v454
        %456 = vmatmul.f32.gmra.mxu0 %v429
        %v457 = vpop.f32.mrf.mxu0
        %v458 = vadd.f32 %v417, %v457
        %459 = vdwg.mxu0
        %v460 = vld [vmem:[%s5] sm:$0xff]
        %v461 = vld [vmem:[%s5 + $0x8] sm:$0xff]
        %v462 = vld [vmem:[%s5 + $0x10] sm:$0xff]
        %v463 = vld [vmem:[%s5 + $0x18] sm:$0xff]
        %v464 = vld [vmem:[%s6] sm:$0xff]
        %v465 = vld [vmem:[%s6 + $0x8] sm:$0xff]
        %v466 = vld [vmem:[%s6 + $0x10] sm:$0xff]
        %v467 = vld [vmem:[%s6 + $0x18] sm:$0xff]
        %469 = vset.pattern.permute.xlu0 0
        %470 = vperm.xlu0 %469, %v464
        %v471 = vpop.permute.xlu0 %470
        %474 = vset.pattern.permute.xlu0 0
        %475 = vperm.xlu0 %474, %v465
        %v476 = vpop.permute.xlu0 %475
        %479 = vset.pattern.permute.xlu0 0
        %480 = vperm.xlu0 %479, %v466
        %v481 = vpop.permute.xlu0 %480
        %484 = vset.pattern.permute.xlu0 0
        %485 = vperm.xlu0 %484, %v467
        %v486 = vpop.permute.xlu0 %485
        %v489 = vsel %vm349, %v460, 0
        %v492 = vsel %vm349, %v461, 0
        %v495 = vsel %vm349, %v462, 0
        %v498 = vsel %vm349, %v463, 0
        %500 = vmatpush.msra.mxu0 0.0
        %501 = vmatpush.msra.mxu0 0.0
        %502 = vmatpush.msra.mxu0 0.0
        %503 = vmatpush.msra.mxu0 0.0
        %504 = vmatpush.msra.mxu0 0.0
        %505 = vmatpush.msra.mxu0 0.0
        %506 = vmatpush.msra.mxu0 0.0
        %507 = vmatpush.msra.mxu0 0.0
        %508 = vmatpush.msra.mxu0 0.0
        %509 = vmatpush.msra.mxu0 0.0
        %510 = vmatpush.msra.mxu0 0.0
        %511 = vmatpush.msra.mxu0 0.0
        %512 = vmatpush.msra.mxu0 %v320
        %513 = vmatpush.msra.mxu0 %v319
        %514 = vmatpush.msra.mxu0 %v318
        %515 = vmatpush.msra.mxu0 %v317
        %516 = vmatmul.f32.gmra.mxu0 %v489
        %v517 = vpop.f32.mrf.mxu0
        %v518 = vadd.f32 %v471, %v517
        %519 = vmatmul.f32.gmra.mxu0 %v492
        %v520 = vpop.f32.mrf.mxu0
        %v521 = vadd.f32 %v476, %v520
        %522 = vmatmul.f32.gmra.mxu0 %v495
        %v523 = vpop.f32.mrf.mxu0
        %v524 = vadd.f32 %v481, %v523
        %525 = vmatmul.f32.gmra.mxu0 %v498
        %v526 = vpop.f32.mrf.mxu0
        %v527 = vadd.f32 %v486, %v526
        %528 = vdwg.mxu0
        %529 = vxpose.xlu0.b32.start [1/16] %v449, 128
        %530 = vxpose.xlu0.b32.cont [2/16] %v452, 128
        %531 = vxpose.xlu0.b32.cont [3/16] %v455, 128
        %532 = vxpose.xlu0.b32.cont [4/16] %v458, 128
        %533 = vxpose.xlu0.b32.cont [5/16] 0.0, 128
        %534 = vxpose.xlu0.b32.cont [6/16] 0.0, 128
        %535 = vxpose.xlu0.b32.cont [7/16] 0.0, 128
        %536 = vxpose.xlu0.b32.cont [8/16] 0.0, 128
        %537 = vxpose.xlu0.b32.cont [9/16] 0.0, 128
        %538 = vxpose.xlu0.b32.cont [10/16] 0.0, 128
        %539 = vxpose.xlu0.b32.cont [11/16] 0.0, 128
        %540 = vxpose.xlu0.b32.cont [12/16] 0.0, 128
        %541 = vxpose.xlu0.b32.cont [13/16] 0.0, 128
        %542 = vxpose.xlu0.b32.cont [14/16] 0.0, 128
        %543 = vxpose.xlu0.b32.cont [15/16] 0.0, 128
        %544 = vxpose.xlu0.b32.end [16/16] 0.0, 128
        %v545 = vpop.trf.xlu0
        %v546 = vpop.trf.xlu0
        %v547 = vpop.trf.xlu0
        %v548 = vpop.trf.xlu0
        %v549 = vpop.trf.xlu0
        %v550 = vpop.trf.xlu0
        %v551 = vpop.trf.xlu0
        %v552 = vpop.trf.xlu0
        %v553 = vpop.trf.xlu0
        %v554 = vpop.trf.xlu0
        %v555 = vpop.trf.xlu0
        %v556 = vpop.trf.xlu0
        %v557 = vpop.trf.xlu0
        %v558 = vpop.trf.xlu0
        %v559 = vpop.trf.xlu0
        %v560 = vpop.trf.xlu0
        %v562 = vsel %vm349, %v545, 0
        %v565 = vsel %vm349, %v546, 0
        %567 = vmatpush.msra.mxu0 0.0
        %568 = vmatpush.msra.mxu0 0.0
        %569 = vmatpush.msra.mxu0 0.0
        %570 = vmatpush.msra.mxu0 0.0
        %571 = vmatpush.msra.mxu0 0.0
        %572 = vmatpush.msra.mxu0 0.0
        %573 = vmatpush.msra.mxu0 0.0
        %574 = vmatpush.msra.mxu0 0.0
        %575 = vmatpush.msra.mxu0 0.0
        %576 = vmatpush.msra.mxu0 0.0
        %577 = vmatpush.msra.mxu0 0.0
        %578 = vmatpush.msra.mxu0 0.0
        %579 = vmatpush.msra.mxu0 %v389
        %580 = vmatpush.msra.mxu0 %v386
        %581 = vmatpush.msra.mxu0 %v383
        %582 = vmatpush.msra.mxu0 %v380
        %583 = vmatmul.f32.gmra.mxu0 %v562
        %v584 = vpop.f32.mrf.mxu0
        %v585 = vadd.f32 0.0, %v584
        %586 = vmatmul.f32.gmra.mxu0 %v565
        %v587 = vpop.f32.mrf.mxu0
        %v588 = vadd.f32 0.0, %v587
        %589 = vdwg.mxu0
        %v590 = vmul.f32 %v585, 0.17677669
        %v591 = vmul.f32 %v588, 0.17677669
        %vm592 = vcmask 130048
        %v593 = vsel %vm592, %v590, -inf
        %v594 = vsel %vm592, %v591, -inf
        %v595 = vmax.f32 %v593, %v594
        %v596 = vrot.slane %v595, 4
        %v597 = vmax.f32 %v595, %v596
        %v598 = vrot.slane %v597, 2
        %v599 = vmax.f32 %v597, %v598
        %v600 = vrot.slane %v599, 1
        %v601 = vmax.f32 %v599, %v600
        %v602 = vsub.f32 %v590, %v601
        %v603 = vsub.f32 %v591, %v601
        %v604 = vmul.f32 %v602, 1.442695
        %v605 = vpow.pop %v604
        %v606 = vmul.f32 %v603, 1.442695
        %v607 = vpow.pop %v606
        %v608 = vsel %vm592, %v605, 0.0
        %v609 = vsel %vm592, %v607, 0.0
        %v610 = vadd.f32 %v608, %v609
        %v611 = vrot.slane %v610, 4
        %v612 = vadd.f32 %v610, %v611
        %v613 = vrot.slane %v612, 2
        %v614 = vadd.f32 %v612, %v613
        %v615 = vrot.slane %v614, 1
        %v616 = vadd.f32 %v614, %v615
        %v617 = vrcp.pop %v616
        %v618 = vmul.f32 %v605, %v617
        %v619 = vmul.f32 %v607, %v617
        %v621 = vsel %vm592, %v518, 0
        %v624 = vsel %vm592, %v521, 0
        %v627 = vsel %vm592, %v524, 0
        %v630 = vsel %vm592, %v527, 0
        %632 = vmatpush.msra.mxu0 0.0
        %633 = vmatpush.msra.mxu0 0.0
        %634 = vmatpush.msra.mxu0 0.0
        %635 = vmatpush.msra.mxu0 0.0
        %636 = vmatpush.msra.mxu0 0.0
        %637 = vmatpush.msra.mxu0 0.0
        %638 = vmatpush.msra.mxu0 0.0
        %639 = vmatpush.msra.mxu0 0.0
        %640 = vmatpush.msra.mxu0 0.0
        %641 = vmatpush.msra.mxu0 0.0
        %642 = vmatpush.msra.mxu0 0.0
        %643 = vmatpush.msra.mxu0 0.0
        %644 = vmatpush.msra.mxu0 0.0
        %645 = vmatpush.msra.mxu0 0.0
        %646 = vmatpush.msra.mxu0 %v619
        %647 = vmatpush.msra.mxu0 %v618
        %648 = vmatmul.f32.gmra.mxu0 %v621
        %v649 = vpop.f32.mrf.mxu0
        %v650 = vadd.f32 0.0, %v649
        %651 = vmatmul.f32.gmra.mxu0 %v624
        %v652 = vpop.f32.mrf.mxu0
        %v653 = vadd.f32 0.0, %v652
        %654 = vmatmul.f32.gmra.mxu0 %v627
        %v655 = vpop.f32.mrf.mxu0
        %v656 = vadd.f32 0.0, %v655
        %657 = vmatmul.f32.gmra.mxu0 %v630
        %v658 = vpop.f32.mrf.mxu0
        %v659 = vadd.f32 0.0, %v658
        %660 = vdwg.mxu0
        %661 = vst.msk [vmem:[%s316] sm:$0xff] %vm592, %v650
        %662 = vst.msk [vmem:[%s316 + $0x8] sm:$0xff] %vm592, %v653
        %663 = vst.msk [vmem:[%s316 + $0x10] sm:$0xff] %vm592, %v656
        %664 = vst.msk [vmem:[%s316 + $0x18] sm:$0xff] %vm592, %v659
        %665 = vst.msk [vmem:[%s306] sm:$0xff] %vm592, %v618
        %666 = vst.msk [vmem:[%s306 + $0x8] sm:$0xff] %vm592, %v619
        %p667 = scmp.lt.s32.totalorder %s23, 1
        %s668 = scalar_select %p667, %s23, 1
        %s669 = smul.addr %s668, 4
        %s670 = smul.addr %s669, 8
        %s671 = scalar_lea.vmem %s7, %s670
        %s672 = sand.u32 %s209, 1
        %s673 = scalar_lea.sflag [#allocation3], %s672
        %s674 = sand.u32 %s209, 1
        %s675 = smul.addr %s674, 16
        %s676 = scalar_lea.vmem [#allocation2], %s675
        // Predicated region
        $region49: #{tpu_custom_call.1} parent=47 // pred_check
          %p677 = pneg %p193
        $region50: #{tpu_custom_call.1} parent=47 // pred_check_branch
          %679 = sbr.rel (%p677) target = $region52
        $region51: #{tpu_custom_call.1} parent=47 // pred_region
          _
        $region52: #{tpu_custom_call.1} parent=47 // pred_fallthru
          _
        // Predicated region
        $region53: #{tpu_custom_call.1} parent=47 // pred_check
          %p680 = pneg %p219
        $region54: #{tpu_custom_call.1} parent=47 // pred_check_branch
          %682 = sbr.rel (%p680) target = $region56
        $region55: #{tpu_custom_call.1} parent=47 // pred_region
          %684 = vsyncadd %s673, 0
          %s685 = smul.addr %s23, 2
          %s686 = smul.addr %s685, 8
          %s687 = scalar_lea.hbm %s8, %s686
          %s688 = sshll.u32 %s676, 4
          %s689 = int_to_ptr.vmem [resolvable:$true] %s688
          %s690 = sshll.u32 %s687, 4
          %s691 = int_to_ptr.hbm [resolvable:$true] %s690
          %696 = dma.vmem_to_hbm [thread:$0]  %s689, 256, %s691, %s673, 128, 128, 8
        $region56: #{tpu_custom_call.1} parent=47 // pred_fallthru
          _
      $region48: #{tpu_custom_call.1} parent=5 // pred_fallthru
        _
      %p697 = scmp.le.s32.totalorder 2, %s18
      // Predicated region
      $region57: #{tpu_custom_call.1} parent=5 // pred_check
        %p698 = pneg %p697
      $region58: #{tpu_custom_call.1} parent=5 // pred_check_branch
        %700 = sbr.rel (%p698) target = $region60
      $region59: #{tpu_custom_call.1} parent=5 // pred_region
        %s701 = ssub.s32 %s18, 2
        // Predicated region
        $region61: #{tpu_custom_call.1} parent=59 // pred_check
          %p702 = pneg %p199
        $region62: #{tpu_custom_call.1} parent=59 // pred_check_branch
          %704 = sbr.rel (%p702) target = $region64
        $region63: #{tpu_custom_call.1} parent=59 // pred_region
          %p705 = scmp.lt.s32.totalorder %s24, 1
          %s706 = scalar_select %p705, %s24, 1
          %s707 = smul.addr %s706, 4
          %s708 = smul.addr %s707, 8
          %s709 = scalar_lea.vmem %s7, %s708
        $region64: #{tpu_custom_call.1} parent=59 // pred_fallthru
          _
        // Predicated region
        $region65: #{tpu_custom_call.1} parent=59 // pred_check
          %p710 = pneg %p225
        $region66: #{tpu_custom_call.1} parent=59 // pred_check_branch
          %712 = sbr.rel (%p710) target = $region68
        $region67: #{tpu_custom_call.1} parent=59 // pred_region
          %s713 = sand.u32 %s210, 1
          %s714 = scalar_lea.sflag [#allocation3], %s713
          %s715 = sand.u32 %s210, 1
          %s716 = smul.addr %s715, 16
          %s717 = scalar_lea.vmem [#allocation2], %s716
          %719 = dma.done %s714, 256
        $region68: #{tpu_custom_call.1} parent=59 // pred_fallthru
          _
      $region60: #{tpu_custom_call.1} parent=5 // pred_fallthru
        _
    $region6: #{tpu_custom_call.1} parent=1 // loop_footer
      %s22 = sadd.s32 1, %s18
    $region7: #{tpu_custom_call.1} parent=1 // loop_footer_branch
      %17 = sbr.rel target = $region3
    $region8: #{tpu_custom_call.1} parent=1 // loop_exit
      _
    %720 = vsyncpa [#allocation3], 1
    %s721 = scalar_lea.sflag [#allocation3], 1
    %722 = vsyncpa %s721, 1

</llo_original>
